<compile_context>
chip_gen: v7x
topology: tpu7x:2x2x1
jax: 0.10.0
libtpu: 0.0.40
codegen_flags: <defaults>
</compile_context>

<pallas_src>
import jax
import jax.numpy as jnp
from jax.experimental import pallas as pl
from jax.experimental.pallas import tpu as pltpu

_SUBLANE = 8


def _round_up(n, m):
    return ((n + m - 1) // m) * m


def _server_lenet_kernel(x1_ref, x2_ref, w1_ref, w2_ref, b_ref, o_ref):
    """One fused affine map per batch tile: o = x1 @ w1 + x2 @ w2 + b.

    x1_ref/x2_ref : (tm, 64)  activation tiles (bf16 preferred, f32 accepted)
    w1_ref/w2_ref : (64, 8)   bf16 halves of the fused weight (lane padded 2->8)
    b_ref         : (1, 8)    f32 fused bias
    o_ref         : (tm, 8)   f32 output (real classes live in [:, :2])
    """
    cdt = w1_ref.dtype
    a1 = x1_ref[...]
    a2 = x2_ref[...]
    if a1.dtype != cdt:          # in-VMEM cast only; no extra HBM traffic
        a1 = a1.astype(cdt)
    if a2.dtype != cdt:
        a2 = a2.astype(cdt)
    acc = jnp.dot(a1, w1_ref[...], preferred_element_type=jnp.float32)
    acc = acc + jnp.dot(a2, w2_ref[...], preferred_element_type=jnp.float32)
    o_ref[...] = acc + b_ref[...]


def fuse_server_lenet_params(params, *, split=64, compute_dtype=jnp.bfloat16):
    """Fold the 4 activation-free Linear layers into one affine map.

    Returns {"w_x1": (64, 8), "w_x2": (64, 8), "b": (1, 8)}: the fused weight is
    split along the input axis (x1 rows / x2 rows) and padded from num_classes=2
    to 8 output columns.  Valid ONLY because the module applies no activation.
    """
    w_f = params["w2"] @ params["w3"] @ params["w4"] @ params["w5"]
    b_f = ((params["b2"] @ params["w3"] + params["b3"]) @ params["w4"]
           + params["b4"]) @ params["w5"] + params["b5"]
    num_classes = w_f.shape[1]
    c_pad = _round_up(num_classes, _SUBLANE)
    w_f = jnp.pad(w_f, ((0, 0), (0, c_pad - num_classes)))
    b_f = jnp.pad(b_f, ((0, 0), (0, c_pad - num_classes)))
    return {
        "w_x1": w_f[:split].astype(compute_dtype),
        "w_x2": w_f[split:].astype(compute_dtype),
        "b": b_f.astype(jnp.float32),
        "num_classes": num_classes,
    }


def server_lenet_forward(x1, x2, fused, *, tm_max=2048,
                         min_pallas_batch=256, force_pallas=False):
    """Server_LeNet.forward(x1, x2) using the fused affine parameters."""
    B, f1 = x1.shape
    f2 = x2.shape[1]
    num_classes = fused["num_classes"]
    c_pad = fused["b"].shape[1]

    # Small-batch fallback: the fixed pallas_call launch + pipeline prologue
    # dominates at tiny B; a plain fused XLA dot is strictly faster there.
    if B < min_pallas_batch and not force_pallas:
        h = (x1.astype(jnp.float32) @ fused["w_x1"].astype(jnp.float32)
             + x2.astype(jnp.float32) @ fused["w_x2"].astype(jnp.float32)
             + fused["b"])
        return h[:, :num_classes]

    # Batch tiling: split across (at least) 2 grid steps so both v7x TCs get
    # work, cap at tm_max so the double-buffered working set stays small on
    # v5e's 16 MiB scoped VMEM.  Partial last block handles B % tm != 0; no
    # HBM-side pad copy of the activations.
    tm = max(_SUBLANE, min(tm_max, _round_up(pl.cdiv(B, 2), _SUBLANE)))
    grid = (pl.cdiv(B, tm),)

    out = pl.pallas_call(
        _server_lenet_kernel,
        out_shape=jax.ShapeDtypeStruct((B, c_pad), jnp.float32),
        grid=grid,
        in_specs=[
            pl.BlockSpec((tm, f1), lambda i: (i, 0)),       # x1 tile
            pl.BlockSpec((tm, f2), lambda i: (i, 0)),       # x2 tile
            pl.BlockSpec((f1, c_pad), lambda i: (0, 0)),    # W top half (resident)
            pl.BlockSpec((f2, c_pad), lambda i: (0, 0)),    # W bottom half (resident)
            pl.BlockSpec((1, c_pad), lambda i: (0, 0)),     # fused bias (resident)
        ],
        out_specs=pl.BlockSpec((tm, c_pad), lambda i: (i, 0)),
        compiler_params=pltpu.CompilerParams(
            dimension_semantics=("parallel",)),             # megacore on v7x
    )(x1, x2, fused["w_x1"], fused["w_x2"], fused["b"])

    return out[:, :num_classes]


def init_params(key, hideen2=128, hideen3=256, hideen4=128, hideen5=64, num_classes=2):
    """Synthetic init mimicking nn.Linear default U[-1/sqrt(fan_in), +1/sqrt(fan_in)].

    Weights stored as (in_features, out_features); biases as (1, out_features).
    """
    dims = [(hideen2, hideen3), (hideen3, hideen4), (hideen4, hideen5), (hideen5, num_classes)]
    names = ["2", "3", "4", "5"]
    params = {}
    for (fan_in, fan_out), n in zip(dims, names):
        key, kw, kb = jax.random.split(key, 3)
        bound = 1.0 / jnp.sqrt(jnp.float32(fan_in))
        params["w" + n] = jax.random.uniform(kw, (fan_in, fan_out), jnp.float32, -bound, bound)
        params["b" + n] = jax.random.uniform(kb, (1, fan_out), jnp.float32, -bound, bound)
    return params


def _reference_forward(x1, x2, params):
    """Pure-JAX f32 reference of the original 4-layer chain (the spec)."""
    x = jnp.concatenate([x1, x2], axis=1)
    h = x @ params["w2"] + params["b2"]
    h = h @ params["w3"] + params["b3"]
    h = h @ params["w4"] + params["b4"]
    h = h @ params["w5"] + params["b5"]
    return h


if __name__ == "__main__":
    key = jax.random.PRNGKey(0)
    kp, k1, k2, k3, k4 = jax.random.split(key, 5)

    params = init_params(kp)
    fused = fuse_server_lenet_params(params)   # precompute once, reuse per call

    # Module defaults: hideen2 = 128 is the concatenated width, so each half is 64.
    # Case 1: tiny batch (B=2) -> XLA fallback path.
    B0 = 2
    x1s = jax.random.normal(k1, (B0, 64), jnp.float32)
    x2s = jax.random.normal(k2, (B0, 64), jnp.float32)
    out_s = jax.block_until_ready(server_lenet_forward(x1s, x2s, fused))
    ref_s = _reference_forward(x1s, x2s, params)
    assert out_s.shape == (B0, 2), out_s.shape
    assert jnp.allclose(out_s, ref_s, atol=3e-2, rtol=3e-2), "fallback mismatch vs reference"

    # Case 2: moderate batch, not a multiple of the tile -> Pallas kernel with a
    # partial last block, bf16 activations (cast at the producer).
    B1 = 300
    x1 = jax.random.normal(k3, (B1, 64), jnp.float32)
    x2 = jax.random.normal(k4, (B1, 64), jnp.float32)
    out = jax.block_until_ready(
        server_lenet_forward(x1.astype(jnp.bfloat16), x2.astype(jnp.bfloat16),
                             fused, force_pallas=True))
    ref = _reference_forward(x1, x2, params)
    assert out.shape == (B1, 2), out.shape
    # bf16 operands / f32 accumulation -> bf16-level tolerance vs the f32 reference.
    assert jnp.allclose(out, ref, atol=3e-2, rtol=3e-2), "pallas mismatch vs reference"

    print("KERNEL_OK")
</pallas_src>

<mosaic_0001>
module attributes {stable_mosaic.version = 11 : i64} {
  func.func @_server_lenet_kernel(%arg0: i32, %arg1: memref<152x64xbf16, #tpu.memory_space<vmem>>, %arg2: memref<152x64xbf16, #tpu.memory_space<vmem>>, %arg3: memref<64x8xbf16, #tpu.memory_space<vmem>>, %arg4: memref<64x8xbf16, #tpu.memory_space<vmem>>, %arg5: memref<1x8xf32, #tpu.memory_space<vmem>>, %arg6: memref<152x8xf32, #tpu.memory_space<vmem>>) attributes {dimension_semantics = [#tpu.dimension_semantics<parallel>], iteration_bounds = array<i64: 2>, scalar_prefetch = 0 : i64, scratch_operands = 0 : i64, tpu.core_type = #tpu.core_type<tc>, window_params = [{transform_indices = @transform_0, window_bounds = array<i64: 152, 64>}, {transform_indices = @transform_1, window_bounds = array<i64: 152, 64>}, {pipeline_mode = #tpu.pipeline_mode<synchronous>, transform_indices = @transform_2, window_bounds = array<i64: 64, 8>}, {pipeline_mode = #tpu.pipeline_mode<synchronous>, transform_indices = @transform_3, window_bounds = array<i64: 64, 8>}, {pipeline_mode = #tpu.pipeline_mode<synchronous>, transform_indices = @transform_4, window_bounds = array<i64: 1, 8>}, {transform_indices = @transform_5, window_bounds = array<i64: 152, 8>}]} {
    %c0 = arith.constant 0 : index
    %c0_0 = arith.constant 0 : index
    %0 = vector.load %arg1[%c0, %c0_0] : memref<152x64xbf16, #tpu.memory_space<vmem>>, vector<152x64xbf16>
    %c0_1 = arith.constant 0 : index
    %c0_2 = arith.constant 0 : index
    %1 = vector.load %arg2[%c0_1, %c0_2] : memref<152x64xbf16, #tpu.memory_space<vmem>>, vector<152x64xbf16>
    %c0_3 = arith.constant 0 : index
    %c0_4 = arith.constant 0 : index
    %2 = vector.load %arg3[%c0_3, %c0_4] : memref<64x8xbf16, #tpu.memory_space<vmem>>, vector<64x8xbf16>
    %cst = arith.constant dense<0.000000e+00> : vector<152x8xf32>
    %3 = tpu.matmul %0, %2, %cst {dimension_numbers = #tpu.dot_dimension_numbers<[1], [0], [0], [1], [0, 0, 1, 1], [], []>} : vector<152x64xbf16>, vector<64x8xbf16>, vector<152x8xf32> -> vector<152x8xf32>
    %c0_5 = arith.constant 0 : index
    %c0_6 = arith.constant 0 : index
    %4 = vector.load %arg4[%c0_5, %c0_6] : memref<64x8xbf16, #tpu.memory_space<vmem>>, vector<64x8xbf16>
    %cst_7 = arith.constant dense<0.000000e+00> : vector<152x8xf32>
    %5 = tpu.matmul %1, %4, %cst_7 {dimension_numbers = #tpu.dot_dimension_numbers<[1], [0], [0], [1], [0, 0, 1, 1], [], []>} : vector<152x64xbf16>, vector<64x8xbf16>, vector<152x8xf32> -> vector<152x8xf32>
    %6 = arith.addf %3, %5 : vector<152x8xf32>
    %c0_8 = arith.constant 0 : index
    %c0_9 = arith.constant 0 : index
    %7 = vector.load %arg5[%c0_8, %c0_9] : memref<1x8xf32, #tpu.memory_space<vmem>>, vector<1x8xf32>
    %8 = vector.broadcast %7 : vector<1x8xf32> to vector<152x8xf32>
    %9 = arith.addf %6, %8 : vector<152x8xf32>
    %c0_10 = arith.constant 0 : index
    %c0_11 = arith.constant 0 : index
    %10 = vector.load %arg6[%c0_10, %c0_11] : memref<152x8xf32, #tpu.memory_space<vmem>>, vector<152x8xf32>
    tpu.vector_store %arg6[%c0_10, %c0_11], %9 {strides = array<i32>} : memref<152x8xf32, #tpu.memory_space<vmem>>, vector<152x8xf32>,
    return
  }
  func.func @transform_0(%arg0: i32) -> (i32, i32) {
    %c0_i32 = arith.constant 0 : i32
    %c0_i32_0 = arith.constant 0 : i32
    return %arg0, %c0_i32 : i32, i32
  }
  func.func @transform_1(%arg0: i32) -> (i32, i32) {
    %c0_i32 = arith.constant 0 : i32
    %c0_i32_0 = arith.constant 0 : i32
    return %arg0, %c0_i32 : i32, i32
  }
  func.func @transform_2(%arg0: i32) -> (i32, i32) {
    %c0_i32 = arith.constant 0 : i32
    %c0_i32_0 = arith.constant 0 : i32
    %c0_i32_1 = arith.constant 0 : i32
    return %c0_i32, %c0_i32_0 : i32, i32
  }
  func.func @transform_3(%arg0: i32) -> (i32, i32) {
    %c0_i32 = arith.constant 0 : i32
    %c0_i32_0 = arith.constant 0 : i32
    %c0_i32_1 = arith.constant 0 : i32
    return %c0_i32, %c0_i32_0 : i32, i32
  }
  func.func @transform_4(%arg0: i32) -> (i32, i32) {
    %c0_i32 = arith.constant 0 : i32
    %c0_i32_0 = arith.constant 0 : i32
    %c0_i32_1 = arith.constant 0 : i32
    return %c0_i32, %c0_i32_0 : i32, i32
  }
  func.func @transform_5(%arg0: i32) -> (i32, i32) {
    %c0_i32 = arith.constant 0 : i32
    %c0_i32_0 = arith.constant 0 : i32
    return %arg0, %c0_i32 : i32, i32
  }
}

</mosaic_0001>

<llo_original>
// kernel: tpu_custom_call.1
$region0: #{tpu_custom_call.1}
  #allocation0 [shape = 'u32[]', space=smem, size = 0x4, offset = 0x4, fixed_abs, tag = 'smem constant byte address 0x4 - core index']
  #allocation1 [shape = 'u32[144,128]{1,0:T(1,128)}', space=vmem, size = 0x12000, scoped, tag = 'internal scratch']
  %s0 = inlined_call_operand.vmem [shape: bf16[300,64], index: 0, kind: input, shape index: {}]
  %s1 = inlined_call_operand.vmem [shape: bf16[300,64], index: 1, kind: input, shape index: {}]
  %s2 = inlined_call_operand.vmem [shape: bf16[64,8], index: 2, kind: input, shape index: {}]
  %s3 = inlined_call_operand.vmem [shape: bf16[64,8], index: 3, kind: input, shape index: {}]
  %s4 = inlined_call_operand.vmem [shape: f32[1,8], index: 4, kind: input, shape index: {}]
  %s5 = inlined_call_operand.vmem [shape: f32[300,8], index: 5, kind: output, shape index: {}]
  %s6 = sld [smem:[#allocation0]]
  $region53: #{tpu_custom_call.1} parent=0
    _
  %s8 = ssub.s32 1, %s6
  %s9 = scalar_select 0, %s8, %s6
  loop: start=0, step=1, limit=4
  $region2: #{tpu_custom_call.1} parent=0 // loop_pre_header
    _
  $region3: #{tpu_custom_call.1} parent=0 // loop_header
    %s11 = sphi 0, %s15
    %p12 = scmp.ge.s32.totalorder %s11, 4
    %s21 = sphi 0, %s23
    %s24 = sphi 0, %s21
    %s25 = sphi 0, %s24
    %s41 = sphi 0, %s25
    %s47 = sphi 0, %s49
    %s50 = sphi 0, %s47
    %s51 = sphi 0, %s50
    %s67 = sphi 0, %s51
    %s71 = sphi 0, %s71
    %s73 = sphi 0, %s71
    %s74 = sphi 0, %s73
    %s88 = sphi 0, %s74
    %s92 = sphi 0, %s92
    %s94 = sphi 0, %s92
    %s95 = sphi 0, %s94
    %s109 = sphi 0, %s95
    %s113 = sphi 0, %s113
    %s115 = sphi 0, %s113
    %s116 = sphi 0, %s115
    %s130 = sphi 0, %s116
    %s136 = sphi 0, %s138
    %s139 = sphi 0, %s136
    %s140 = sphi 0, %s139
    %s156 = sphi 0, %s140
  $region4: #{tpu_custom_call.1} parent=0 // loop_header_branch
    %14 = sbr.rel (%p12) target = $region8
  $region5: #{tpu_custom_call.1} parent=0 // loop_body
    %s16 = ssub.s32 %s11, 1
    %s17 = ssub.s32 %s11, 2
    %s18 = sadd.s32 %s11, 1
    %s19 = ssub.s32 %s11, %s18
    %p20 = scmp.eq.s32.totalorder %s19, 0
    %s22 = sadd.s32 %s21, 1
    %s23 = scalar_select %p20, %s21, %s22
    %p26 = pneg %p20
    %p27 = scmp.eq.s32.totalorder %s11, 1
    %p28 = por %p26, %p27
    %p29 = scmp.ne.s32.totalorder %s21, %s24
    %p30 = scmp.eq.s32.totalorder %s11, 0
    %p31 = por %p29, %p30
    %p32 = scmp.ne.s32.totalorder %s21, %s24
    %p33 = scmp.eq.s32.totalorder %s16, 1
    %p34 = por %p32, %p33
    %p35 = scmp.ne.s32.totalorder %s24, %s25
    %p36 = scmp.eq.s32.totalorder %s16, 0
    %p37 = por %p35, %p36
    %p38 = scmp.ne.s32.totalorder %s24, %s25
    %p39 = scmp.eq.s32.totalorder %s17, 1
    %p40 = por %p38, %p39
    %p42 = scmp.ne.s32.totalorder %s25, %s41
    %p43 = scmp.eq.s32.totalorder %s17, 0
    %p44 = por %p42, %p43
    %s45 = ssub.s32 %s11, %s18
    %p46 = scmp.eq.s32.totalorder %s45, 0
    %s48 = sadd.s32 %s47, 1
    %s49 = scalar_select %p46, %s47, %s48
    %p52 = pneg %p46
    %p53 = scmp.eq.s32.totalorder %s11, 1
    %p54 = por %p52, %p53
    %p55 = scmp.ne.s32.totalorder %s47, %s50
    %p56 = scmp.eq.s32.totalorder %s11, 0
    %p57 = por %p55, %p56
    %p58 = scmp.ne.s32.totalorder %s47, %s50
    %p59 = scmp.eq.s32.totalorder %s16, 1
    %p60 = por %p58, %p59
    %p61 = scmp.ne.s32.totalorder %s50, %s51
    %p62 = scmp.eq.s32.totalorder %s16, 0
    %p63 = por %p61, %p62
    %p64 = scmp.ne.s32.totalorder %s50, %s51
    %p65 = scmp.eq.s32.totalorder %s17, 1
    %p66 = por %p64, %p65
    %p68 = scmp.ne.s32.totalorder %s51, %s67
    %p69 = scmp.eq.s32.totalorder %s17, 0
    %p70 = por %p68, %p69
    %s72 = sadd.s32 %s71, 1
    %p75 = scmp.eq.s32.totalorder %s11, 1
    %p76 = scmp.ne.s32.totalorder %s71, %s73
    %p77 = scmp.eq.s32.totalorder %s11, 0
    %p78 = por %p76, %p77
    %p79 = scmp.ne.s32.totalorder %s71, %s73
    %p80 = scmp.eq.s32.totalorder %s16, 1
    %p81 = por %p79, %p80
    %p82 = scmp.ne.s32.totalorder %s73, %s74
    %p83 = scmp.eq.s32.totalorder %s16, 0
    %p84 = por %p82, %p83
    %p85 = scmp.ne.s32.totalorder %s73, %s74
    %p86 = scmp.eq.s32.totalorder %s17, 1
    %p87 = por %p85, %p86
    %p89 = scmp.ne.s32.totalorder %s74, %s88
    %p90 = scmp.eq.s32.totalorder %s17, 0
    %p91 = por %p89, %p90
    %s93 = sadd.s32 %s92, 1
    %p96 = scmp.eq.s32.totalorder %s11, 1
    %p97 = scmp.ne.s32.totalorder %s92, %s94
    %p98 = scmp.eq.s32.totalorder %s11, 0
    %p99 = por %p97, %p98
    %p100 = scmp.ne.s32.totalorder %s92, %s94
    %p101 = scmp.eq.s32.totalorder %s16, 1
    %p102 = por %p100, %p101
    %p103 = scmp.ne.s32.totalorder %s94, %s95
    %p104 = scmp.eq.s32.totalorder %s16, 0
    %p105 = por %p103, %p104
    %p106 = scmp.ne.s32.totalorder %s94, %s95
    %p107 = scmp.eq.s32.totalorder %s17, 1
    %p108 = por %p106, %p107
    %p110 = scmp.ne.s32.totalorder %s95, %s109
    %p111 = scmp.eq.s32.totalorder %s17, 0
    %p112 = por %p110, %p111
    %s114 = sadd.s32 %s113, 1
    %p117 = scmp.eq.s32.totalorder %s11, 1
    %p118 = scmp.ne.s32.totalorder %s113, %s115
    %p119 = scmp.eq.s32.totalorder %s11, 0
    %p120 = por %p118, %p119
    %p121 = scmp.ne.s32.totalorder %s113, %s115
    %p122 = scmp.eq.s32.totalorder %s16, 1
    %p123 = por %p121, %p122
    %p124 = scmp.ne.s32.totalorder %s115, %s116
    %p125 = scmp.eq.s32.totalorder %s16, 0
    %p126 = por %p124, %p125
    %p127 = scmp.ne.s32.totalorder %s115, %s116
    %p128 = scmp.eq.s32.totalorder %s17, 1
    %p129 = por %p127, %p128
    %p131 = scmp.ne.s32.totalorder %s116, %s130
    %p132 = scmp.eq.s32.totalorder %s17, 0
    %p133 = por %p131, %p132
    %s134 = ssub.s32 %s11, %s18
    %p135 = scmp.eq.s32.totalorder %s134, 0
    %s137 = sadd.s32 %s136, 1
    %s138 = scalar_select %p135, %s136, %s137
    %p141 = pneg %p135
    %p142 = scmp.eq.s32.totalorder %s11, 1
    %p143 = por %p141, %p142
    %p144 = scmp.ne.s32.totalorder %s136, %s139
    %p145 = scmp.eq.s32.totalorder %s11, 0
    %p146 = por %p144, %p145
    %p147 = scmp.ne.s32.totalorder %s136, %s139
    %p148 = scmp.eq.s32.totalorder %s16, 1
    %p149 = por %p147, %p148
    %p150 = scmp.ne.s32.totalorder %s139, %s140
    %p151 = scmp.eq.s32.totalorder %s16, 0
    %p152 = por %p150, %p151
    %p153 = scmp.ne.s32.totalorder %s139, %s140
    %p154 = scmp.eq.s32.totalorder %s17, 1
    %p155 = por %p153, %p154
    %p157 = scmp.ne.s32.totalorder %s140, %s156
    %p158 = scmp.eq.s32.totalorder %s17, 0
    %p159 = por %p157, %p158
    %p160 = scmp.le.s32.totalorder 1, %s11
    %p161 = scmp.lt.s32.totalorder %s11, 3
    %p162 = pnand %p160, %p161
    %p163 = pneg %p162
    // Predicated region
    $region9: #{tpu_custom_call.1} parent=5 // pred_check
      _
    $region10: #{tpu_custom_call.1} parent=5 // pred_check_branch
      %165 = sbr.rel (%p162) target = $region12
    $region11: #{tpu_custom_call.1} parent=5 // pred_region
      %s166 = ssub.s32 %s11, 1
      // Predicated region
      $region13: #{tpu_custom_call.1} parent=11 // pred_check
        %p167 = pneg %p84
      $region14: #{tpu_custom_call.1} parent=11 // pred_check_branch
        %169 = sbr.rel (%p167) target = $region16
      $region15: #{tpu_custom_call.1} parent=11 // pred_region
        _
      $region16: #{tpu_custom_call.1} parent=11 // pred_fallthru
        _
      // Predicated region
      $region17: #{tpu_custom_call.1} parent=11 // pred_check
        %p170 = pneg %p105
      $region18: #{tpu_custom_call.1} parent=11 // pred_check_branch
        %172 = sbr.rel (%p170) target = $region20
      $region19: #{tpu_custom_call.1} parent=11 // pred_region
        _
      $region20: #{tpu_custom_call.1} parent=11 // pred_fallthru
        _
      // Predicated region
      $region21: #{tpu_custom_call.1} parent=11 // pred_check
        %p173 = pneg %p126
      $region22: #{tpu_custom_call.1} parent=11 // pred_check_branch
        %175 = sbr.rel (%p173) target = $region24
      $region23: #{tpu_custom_call.1} parent=11 // pred_region
        _
      $region24: #{tpu_custom_call.1} parent=11 // pred_fallthru
        _
    $region12: #{tpu_custom_call.1} parent=5 // pred_fallthru
      _
    %p176 = scmp.lt.s32.totalorder %s11, 2
    // Predicated region
    $region25: #{tpu_custom_call.1} parent=5 // pred_check
      %p177 = pneg %p176
    $region26: #{tpu_custom_call.1} parent=5 // pred_check_branch
      %179 = sbr.rel (%p177) target = $region28
    $region27: #{tpu_custom_call.1} parent=5 // pred_region
      // Predicated region
      $region29: #{tpu_custom_call.1} parent=27 // pred_check
        %p180 = pneg %p31
      $region30: #{tpu_custom_call.1} parent=27 // pred_check_branch
        %182 = sbr.rel (%p180) target = $region32
      $region31: #{tpu_custom_call.1} parent=27 // pred_region
        %s183 = smul.u32 19, %s11
        %p184 = scmp.lt.s32.totalorder %s183, 37
        %s185 = scalar_select %p184, %s183, 37
        %s186 = smul.addr %s185, 4
        %s187 = scalar_lea.vmem %s0, %s186
        %s188 = smul.u32 19, %s11
      $region32: #{tpu_custom_call.1} parent=27 // pred_fallthru
        _
      // Predicated region
      $region33: #{tpu_custom_call.1} parent=27 // pred_check
        %p189 = pneg %p57
      $region34: #{tpu_custom_call.1} parent=27 // pred_check_branch
        %191 = sbr.rel (%p189) target = $region36
      $region35: #{tpu_custom_call.1} parent=27 // pred_region
        %s192 = smul.u32 19, %s11
        %p193 = scmp.lt.s32.totalorder %s192, 37
        %s194 = scalar_select %p193, %s192, 37
        %s195 = smul.addr %s194, 4
        %s196 = scalar_lea.vmem %s1, %s195
        %s197 = smul.u32 19, %s11
      $region36: #{tpu_custom_call.1} parent=27 // pred_fallthru
        _
    $region28: #{tpu_custom_call.1} parent=5 // pred_fallthru
      _
    %p198 = scmp.le.s32.totalorder 1, %s11
    %p199 = scmp.lt.s32.totalorder %s11, 3
    %p200 = pnand %p198, %p199
    %p201 = pneg %p200
    // Predicated region
    $region37: #{tpu_custom_call.1} parent=5 // pred_check
      _
    $region38: #{tpu_custom_call.1} parent=5 // pred_check_branch
      %203 = sbr.rel (%p200) target = $region40
    $region39: #{tpu_custom_call.1} parent=5 // pred_region
      %s204 = ssub.s32 %s11, 1
      %s205 = smul.u32 19, %s16
      %p206 = scmp.lt.s32.totalorder %s205, 37
      %s207 = scalar_select %p206, %s205, 37
      %s208 = smul.addr %s207, 4
      %s209 = scalar_lea.vmem %s0, %s208
      %p210 = pneg %p37
      %p211 = pneg %p34
      %s212 = smul.u32 19, %s16
      %p213 = scmp.lt.s32.totalorder %s212, 37
      %s214 = scalar_select %p213, %s212, 37
      %s215 = smul.addr %s214, 4
      %s216 = scalar_lea.vmem %s1, %s215
      %p217 = pneg %p63
      %p218 = pneg %p60
      %p219 = pneg %p84
      %p220 = pneg %p81
      %p221 = pneg %p105
      %p222 = pneg %p102
      %p223 = pneg %p126
      %p224 = pneg %p123
      %p225 = pneg %p152
      %p226 = pneg %p149
      %s227 = smul.u32 19, %s16
      %p228 = scmp.lt.s32.totalorder %s227, 37
      %s229 = scalar_select %p228, %s227, 37
      %s230 = smul.addr %s229, 8
      %s231 = scalar_lea.vmem %s5, %s230
      %s232 = smul.u32 19, %s16
      %p233 = scmp.lt.s32.totalorder %s232, 37
      %s234 = scalar_select %p233, %s232, 37
      %s235 = smul.addr %s234, 4
      %s236 = scalar_lea.vmem %s0, %s235
      %s237 = smul.u32 19, %s16
      %s238 = smul.u32 19, %s16
      %p239 = scmp.lt.s32.totalorder %s238, 37
      %s240 = scalar_select %p239, %s238, 37
      %s241 = smul.addr %s240, 4
      %s242 = scalar_lea.vmem %s1, %s241
      %s243 = smul.u32 19, %s16
      %s244 = smul.u32 19, %s16
      %p245 = scmp.lt.s32.totalorder %s244, 37
      %s246 = scalar_select %p245, %s244, 37
      %s247 = smul.addr %s246, 8
      %s248 = scalar_lea.vmem %s5, %s247
      %s249 = smul.u32 19, %s16
      %v251 = vld [vmem:[%s236] sm:$0xf]
      %v252 = vld [vmem:[%s236 + $0x4] sm:$0xf]
      %v253 = vld [vmem:[%s236 + $0x8] sm:$0xf]
      %v254 = vld [vmem:[%s236 + $0xc] sm:$0xf]
      %v255 = vld [vmem:[%s236 + $0x10] sm:$0xf]
      %v256 = vld [vmem:[%s236 + $0x14] sm:$0xf]
      %v257 = vld [vmem:[%s236 + $0x18] sm:$0xf]
      %v258 = vld [vmem:[%s236 + $0x1c] sm:$0xf]
      %v259 = vld [vmem:[%s236 + $0x20] sm:$0xf]
      %v260 = vld [vmem:[%s236 + $0x24] sm:$0xf]
      %v261 = vld [vmem:[%s236 + $0x28] sm:$0xf]
      %v262 = vld [vmem:[%s236 + $0x2c] sm:$0xf]
      %v263 = vld [vmem:[%s236 + $0x30] sm:$0xf]
      %v264 = vld [vmem:[%s236 + $0x34] sm:$0xf]
      %v265 = vld [vmem:[%s236 + $0x38] sm:$0xf]
      %v266 = vld [vmem:[%s236 + $0x3c] sm:$0xf]
      %v267 = vld [vmem:[%s236 + $0x40] sm:$0xf]
      %v268 = vld [vmem:[%s236 + $0x44] sm:$0xf]
      %v269 = vld [vmem:[%s236 + $0x48] sm:$0xf]
      %v270 = vld [vmem:[%s242] sm:$0xf]
      %v271 = vld [vmem:[%s242 + $0x4] sm:$0xf]
      %v272 = vld [vmem:[%s242 + $0x8] sm:$0xf]
      %v273 = vld [vmem:[%s242 + $0xc] sm:$0xf]
      %v274 = vld [vmem:[%s242 + $0x10] sm:$0xf]
      %v275 = vld [vmem:[%s242 + $0x14] sm:$0xf]
      %v276 = vld [vmem:[%s242 + $0x18] sm:$0xf]
      %v277 = vld [vmem:[%s242 + $0x1c] sm:$0xf]
      %v278 = vld [vmem:[%s242 + $0x20] sm:$0xf]
      %v279 = vld [vmem:[%s242 + $0x24] sm:$0xf]
      %v280 = vld [vmem:[%s242 + $0x28] sm:$0xf]
      %v281 = vld [vmem:[%s242 + $0x2c] sm:$0xf]
      %v282 = vld [vmem:[%s242 + $0x30] sm:$0xf]
      %v283 = vld [vmem:[%s242 + $0x34] sm:$0xf]
      %v284 = vld [vmem:[%s242 + $0x38] sm:$0xf]
      %v285 = vld [vmem:[%s242 + $0x3c] sm:$0xf]
      %v286 = vld [vmem:[%s242 + $0x40] sm:$0xf]
      %v287 = vld [vmem:[%s242 + $0x44] sm:$0xf]
      %v288 = vld [vmem:[%s242 + $0x48] sm:$0xf]
      %v289 = vld [vmem:[%s2] sm:$0xf]
      %v290 = vld [vmem:[%s2 + $0x4] sm:$0xf]
      %v291 = vld [vmem:[%s2 + $0x8] sm:$0xf]
      %v292 = vld [vmem:[%s2 + $0xc] sm:$0xf]
      %v293 = vld [vmem:[%s2 + $0x10] sm:$0xf]
      %v294 = vld [vmem:[%s2 + $0x14] sm:$0xf]
      %v295 = vld [vmem:[%s2 + $0x18] sm:$0xf]
      %v296 = vld [vmem:[%s2 + $0x1c] sm:$0xf]
      %v297 = vld [vmem:[%s3] sm:$0xf]
      %v298 = vld [vmem:[%s3 + $0x4] sm:$0xf]
      %v299 = vld [vmem:[%s3 + $0x8] sm:$0xf]
      %v300 = vld [vmem:[%s3 + $0xc] sm:$0xf]
      %v301 = vld [vmem:[%s3 + $0x10] sm:$0xf]
      %v302 = vld [vmem:[%s3 + $0x14] sm:$0xf]
      %v303 = vld [vmem:[%s3 + $0x18] sm:$0xf]
      %v304 = vld [vmem:[%s3 + $0x1c] sm:$0xf]
      %v324 = vunpack.c.l.b16 %v270
      %v325 = vunpack.c.l.b16 %v271
      %v326 = vunpack.c.l.b16 %v272
      %v327 = vunpack.c.l.b16 %v273
      %v328 = vunpack.c.l.b16 %v274
      %v329 = vunpack.c.l.b16 %v275
      %v330 = vunpack.c.l.b16 %v276
      %v331 = vunpack.c.l.b16 %v277
      %v332 = vunpack.c.l.b16 %v278
      %v333 = vunpack.c.l.b16 %v279
      %v334 = vunpack.c.l.b16 %v280
      %v335 = vunpack.c.l.b16 %v281
      %v336 = vunpack.c.l.b16 %v282
      %v337 = vunpack.c.l.b16 %v283
      %v338 = vunpack.c.l.b16 %v284
      %v339 = vunpack.c.l.b16 %v285
      %v340 = vunpack.c.l.b16 %v286
      %v341 = vunpack.c.l.b16 %v287
      %v342 = vunpack.c.l.b16 %v288
      %v343 = vpack.c.b16 %v325, %v324
      %v344 = vpack.c.b16 %v327, %v326
      %v345 = vpack.c.b16 %v329, %v328
      %v346 = vpack.c.b16 %v331, %v330
      %v347 = vpack.c.b16 %v333, %v332
      %v348 = vpack.c.b16 %v335, %v334
      %v349 = vpack.c.b16 %v337, %v336
      %v350 = vpack.c.b16 %v339, %v338
      %v351 = vpack.c.b16 %v341, %v340
      %v352 = vpack.c.b16 %v342, %v342
      %v361 = vunpack.c.l.b16 %v297
      %v362 = vunpack.c.l.b16 %v298
      %v363 = vunpack.c.l.b16 %v299
      %v364 = vunpack.c.l.b16 %v300
      %v365 = vunpack.c.l.b16 %v301
      %v366 = vunpack.c.l.b16 %v302
      %v367 = vunpack.c.l.b16 %v303
      %v368 = vunpack.c.l.b16 %v304
      %v369 = vpack.c.b16 %v362, %v361
      %v370 = vpack.c.b16 %v364, %v363
      %v371 = vpack.c.b16 %v366, %v365
      %v372 = vpack.c.b16 %v368, %v367
      %vm377 = vcmask 523264
      %v379 = vsel %vm377, %v343, 0
      %v382 = vsel %vm377, %v344, 0
      %v385 = vsel %vm377, %v345, 0
      %v388 = vsel %vm377, %v346, 0
      %v391 = vsel %vm377, %v347, 0
      %v394 = vsel %vm377, %v348, 0
      %v397 = vsel %vm377, %v349, 0
      %v400 = vsel %vm377, %v350, 0
      %v403 = vsel %vm377, %v351, 0
      %v406 = vsel %vm377, %v352, 0
      %408 = vmatprep.subr.bf16.mxu0 0
      %409 = vmatpush1.bf16.msra.mxu0 %v369
      %410 = vmatprep.subr.bf16.mxu0 0
      %411 = vmatpush1.bf16.msra.mxu0 %v370
      %412 = vmatprep.subr.bf16.mxu0 0
      %413 = vmatpush1.bf16.msra.mxu0 %v371
      %414 = vmatprep.subr.bf16.mxu0 0
      %415 = vmatpush1.bf16.msra.mxu0 %v372
      %416 = vmatprep.subr.bf16.mxu0 0
      %417 = vmatpush1.bf16.msra.mxu0 0
      %418 = vmatprep.subr.bf16.mxu0 0
      %419 = vmatpush1.bf16.msra.mxu0 0
      %420 = vmatprep.subr.bf16.mxu0 0
      %421 = vmatpush1.bf16.msra.mxu0 0
      %422 = vmatprep.subr.bf16.mxu0 0
      %423 = vmatpush1.bf16.msra.mxu0 0
      %424 = vmatprep.subr.bf16.mxu0 0
      %425 = vmatpush1.bf16.msra.mxu0 0
      %426 = vmatprep.subr.bf16.mxu0 0
      %427 = vmatpush1.bf16.msra.mxu0 0
      %428 = vmatprep.subr.bf16.mxu0 0
      %429 = vmatpush1.bf16.msra.mxu0 0
      %430 = vmatprep.subr.bf16.mxu0 0
      %431 = vmatpush1.bf16.msra.mxu0 0
      %432 = vmatprep.subr.bf16.mxu0 0
      %433 = vmatpush1.bf16.msra.mxu0 0
      %434 = vmatprep.subr.bf16.mxu0 0
      %435 = vmatpush1.bf16.msra.mxu0 0
      %436 = vmatprep.subr.bf16.mxu0 0
      %437 = vmatpush1.bf16.msra.mxu0 0
      %438 = vmatprep.subr.bf16.mxu0 0
      %439 = vmatpush1.bf16.msra.mxu0 0
      %440 = vmatprep.mubr.bf16.mxu0 0
      %441 = vmatmul.mubr.bf16.gmra.mrb[0].mxu0 %v379
      %v442 = vpop.f32.mrb[0].mxu0
      %v443 = vadd.f32 0.0, %v442
      %v444 = vpop.f32.mrb[0].mxu0
      %v445 = vpop.f32.mrb[0].mxu0
      %v446 = vadd.f32 0.0, %v445
      %v447 = vpop.f32.mrb[0].mxu0
      %448 = vmatprep.mubr.bf16.mxu0 0
      %449 = vmatmul.mubr.bf16.gmra.mrb[0].mxu0 %v382
      %v450 = vpop.f32.mrb[0].mxu0
      %v451 = vadd.f32 0.0, %v450
      %v452 = vpop.f32.mrb[0].mxu0
      %v453 = vpop.f32.mrb[0].mxu0
      %v454 = vadd.f32 0.0, %v453
      %v455 = vpop.f32.mrb[0].mxu0
      %456 = vmatprep.mubr.bf16.mxu0 0
      %457 = vmatmul.mubr.bf16.gmra.mrb[0].mxu0 %v385
      %v458 = vpop.f32.mrb[0].mxu0
      %v459 = vadd.f32 0.0, %v458
      %v460 = vpop.f32.mrb[0].mxu0
      %v461 = vpop.f32.mrb[0].mxu0
      %v462 = vadd.f32 0.0, %v461
      %v463 = vpop.f32.mrb[0].mxu0
      %464 = vmatprep.mubr.bf16.mxu0 0
      %465 = vmatmul.mubr.bf16.gmra.mrb[0].mxu0 %v388
      %v466 = vpop.f32.mrb[0].mxu0
      %v467 = vadd.f32 0.0, %v466
      %v468 = vpop.f32.mrb[0].mxu0
      %v469 = vpop.f32.mrb[0].mxu0
      %v470 = vadd.f32 0.0, %v469
      %v471 = vpop.f32.mrb[0].mxu0
      %472 = vmatprep.mubr.bf16.mxu0 0
      %473 = vmatmul.mubr.bf16.gmra.mrb[0].mxu0 %v391
      %v474 = vpop.f32.mrb[0].mxu0
      %v475 = vadd.f32 0.0, %v474
      %v476 = vpop.f32.mrb[0].mxu0
      %v477 = vpop.f32.mrb[0].mxu0
      %v478 = vadd.f32 0.0, %v477
      %v479 = vpop.f32.mrb[0].mxu0
      %480 = vmatprep.mubr.bf16.mxu0 0
      %481 = vmatmul.mubr.bf16.gmra.mrb[0].mxu0 %v394
      %v482 = vpop.f32.mrb[0].mxu0
      %v483 = vadd.f32 0.0, %v482
      %v484 = vpop.f32.mrb[0].mxu0
      %v485 = vpop.f32.mrb[0].mxu0
      %v486 = vadd.f32 0.0, %v485
      %v487 = vpop.f32.mrb[0].mxu0
      %488 = vmatprep.mubr.bf16.mxu0 0
      %489 = vmatmul.mubr.bf16.gmra.mrb[0].mxu0 %v397
      %v490 = vpop.f32.mrb[0].mxu0
      %v491 = vadd.f32 0.0, %v490
      %v492 = vpop.f32.mrb[0].mxu0
      %v493 = vpop.f32.mrb[0].mxu0
      %v494 = vadd.f32 0.0, %v493
      %v495 = vpop.f32.mrb[0].mxu0
      %496 = vmatprep.mubr.bf16.mxu0 0
      %497 = vmatmul.mubr.bf16.gmra.mrb[0].mxu0 %v400
      %v498 = vpop.f32.mrb[0].mxu0
      %v499 = vadd.f32 0.0, %v498
      %v500 = vpop.f32.mrb[0].mxu0
      %v501 = vpop.f32.mrb[0].mxu0
      %v502 = vadd.f32 0.0, %v501
      %v503 = vpop.f32.mrb[0].mxu0
      %504 = vmatprep.mubr.bf16.mxu0 0
      %505 = vmatmul.mubr.bf16.gmra.mrb[0].mxu0 %v403
      %v506 = vpop.f32.mrb[0].mxu0
      %v507 = vadd.f32 0.0, %v506
      %v508 = vpop.f32.mrb[0].mxu0
      %v509 = vpop.f32.mrb[0].mxu0
      %v510 = vadd.f32 0.0, %v509
      %v511 = vpop.f32.mrb[0].mxu0
      %512 = vmatprep.mubr.bf16.mxu0 0
      %513 = vmatmul.mubr.bf16.gmra.mrb[0].mxu0 %v406
      %v514 = vpop.f32.mrb[0].mxu0
      %v515 = vadd.f32 0.0, %v514
      %v516 = vpop.f32.mrb[0].mxu0
      %v517 = vpop.f32.mrb[0].mxu0
      %v518 = vpop.f32.mrb[0].mxu0
      %519 = vdwg.mxu0
      %v539 = vunpack.c.l.b16 %v251
      %v540 = vunpack.c.l.b16 %v252
      %v541 = vunpack.c.l.b16 %v253
      %v542 = vunpack.c.l.b16 %v254
      %v543 = vunpack.c.l.b16 %v255
      %v544 = vunpack.c.l.b16 %v256
      %v545 = vunpack.c.l.b16 %v257
      %v546 = vunpack.c.l.b16 %v258
      %v547 = vunpack.c.l.b16 %v259
      %v548 = vunpack.c.l.b16 %v260
      %v549 = vunpack.c.l.b16 %v261
      %v550 = vunpack.c.l.b16 %v262
      %v551 = vunpack.c.l.b16 %v263
      %v552 = vunpack.c.l.b16 %v264
      %v553 = vunpack.c.l.b16 %v265
      %v554 = vunpack.c.l.b16 %v266
      %v555 = vunpack.c.l.b16 %v267
      %v556 = vunpack.c.l.b16 %v268
      %v557 = vunpack.c.l.b16 %v269
      %v558 = vpack.c.b16 %v540, %v539
      %v559 = vpack.c.b16 %v542, %v541
      %v560 = vpack.c.b16 %v544, %v543
      %v561 = vpack.c.b16 %v546, %v545
      %v562 = vpack.c.b16 %v548, %v547
      %v563 = vpack.c.b16 %v550, %v549
      %v564 = vpack.c.b16 %v552, %v551
      %v565 = vpack.c.b16 %v554, %v553
      %v566 = vpack.c.b16 %v556, %v555
      %v567 = vpack.c.b16 %v557, %v557
      %v576 = vunpack.c.l.b16 %v289
      %v577 = vunpack.c.l.b16 %v290
      %v578 = vunpack.c.l.b16 %v291
      %v579 = vunpack.c.l.b16 %v292
      %v580 = vunpack.c.l.b16 %v293
      %v581 = vunpack.c.l.b16 %v294
      %v582 = vunpack.c.l.b16 %v295
      %v583 = vunpack.c.l.b16 %v296
      %v584 = vpack.c.b16 %v577, %v576
      %v585 = vpack.c.b16 %v579, %v578
      %v586 = vpack.c.b16 %v581, %v580
      %v587 = vpack.c.b16 %v583, %v582
      %v593 = vsel %vm377, %v558, 0
      %v596 = vsel %vm377, %v559, 0
      %v599 = vsel %vm377, %v560, 0
      %v602 = vsel %vm377, %v561, 0
      %v605 = vsel %vm377, %v562, 0
      %v608 = vsel %vm377, %v563, 0
      %v611 = vsel %vm377, %v564, 0
      %v614 = vsel %vm377, %v565, 0
      %v617 = vsel %vm377, %v566, 0
      %v620 = vsel %vm377, %v567, 0
      %622 = vmatprep.subr.bf16.mxu0 0
      %623 = vmatpush1.bf16.msra.mxu0 %v584
      %624 = vmatprep.subr.bf16.mxu0 0
      %625 = vmatpush1.bf16.msra.mxu0 %v585
      %626 = vmatprep.subr.bf16.mxu0 0
      %627 = vmatpush1.bf16.msra.mxu0 %v586
      %628 = vmatprep.subr.bf16.mxu0 0
      %629 = vmatpush1.bf16.msra.mxu0 %v587
      %630 = vmatprep.subr.bf16.mxu0 0
      %631 = vmatpush1.bf16.msra.mxu0 0
      %632 = vmatprep.subr.bf16.mxu0 0
      %633 = vmatpush1.bf16.msra.mxu0 0
      %634 = vmatprep.subr.bf16.mxu0 0
      %635 = vmatpush1.bf16.msra.mxu0 0
      %636 = vmatprep.subr.bf16.mxu0 0
      %637 = vmatpush1.bf16.msra.mxu0 0
      %638 = vmatprep.subr.bf16.mxu0 0
      %639 = vmatpush1.bf16.msra.mxu0 0
      %640 = vmatprep.subr.bf16.mxu0 0
      %641 = vmatpush1.bf16.msra.mxu0 0
      %642 = vmatprep.subr.bf16.mxu0 0
      %643 = vmatpush1.bf16.msra.mxu0 0
      %644 = vmatprep.subr.bf16.mxu0 0
      %645 = vmatpush1.bf16.msra.mxu0 0
      %646 = vmatprep.subr.bf16.mxu0 0
      %647 = vmatpush1.bf16.msra.mxu0 0
      %648 = vmatprep.subr.bf16.mxu0 0
      %649 = vmatpush1.bf16.msra.mxu0 0
      %650 = vmatprep.subr.bf16.mxu0 0
      %651 = vmatpush1.bf16.msra.mxu0 0
      %652 = vmatprep.subr.bf16.mxu0 0
      %653 = vmatpush1.bf16.msra.mxu0 0
      %654 = vmatprep.mubr.bf16.mxu0 0
      %655 = vmatmul.mubr.bf16.gmra.mrb[0].mxu0 %v593
      %v656 = vpop.f32.mrb[0].mxu0
      %v657 = vadd.f32 %v443, %v656
      %v658 = vpop.f32.mrb[0].mxu0
      %v659 = vpop.f32.mrb[0].mxu0
      %v660 = vadd.f32 %v446, %v659
      %v661 = vpop.f32.mrb[0].mxu0
      %662 = vmatprep.mubr.bf16.mxu0 0
      %663 = vmatmul.mubr.bf16.gmra.mrb[0].mxu0 %v596
      %v664 = vpop.f32.mrb[0].mxu0
      %v665 = vadd.f32 %v451, %v664
      %v666 = vpop.f32.mrb[0].mxu0
      %v667 = vpop.f32.mrb[0].mxu0
      %v668 = vadd.f32 %v454, %v667
      %v669 = vpop.f32.mrb[0].mxu0
      %670 = vmatprep.mubr.bf16.mxu0 0
      %671 = vmatmul.mubr.bf16.gmra.mrb[0].mxu0 %v599
      %v672 = vpop.f32.mrb[0].mxu0
      %v673 = vadd.f32 %v459, %v672
      %v674 = vpop.f32.mrb[0].mxu0
      %v675 = vpop.f32.mrb[0].mxu0
      %v676 = vadd.f32 %v462, %v675
      %v677 = vpop.f32.mrb[0].mxu0
      %678 = vmatprep.mubr.bf16.mxu0 0
      %679 = vmatmul.mubr.bf16.gmra.mrb[0].mxu0 %v602
      %v680 = vpop.f32.mrb[0].mxu0
      %v681 = vadd.f32 %v467, %v680
      %v682 = vpop.f32.mrb[0].mxu0
      %v683 = vpop.f32.mrb[0].mxu0
      %v684 = vadd.f32 %v470, %v683
      %v685 = vpop.f32.mrb[0].mxu0
      %686 = vmatprep.mubr.bf16.mxu0 0
      %687 = vmatmul.mubr.bf16.gmra.mrb[0].mxu0 %v605
      %v688 = vpop.f32.mrb[0].mxu0
      %v689 = vadd.f32 %v475, %v688
      %v690 = vpop.f32.mrb[0].mxu0
      %v691 = vpop.f32.mrb[0].mxu0
      %v692 = vadd.f32 %v478, %v691
      %v693 = vpop.f32.mrb[0].mxu0
      %694 = vmatprep.mubr.bf16.mxu0 0
      %695 = vmatmul.mubr.bf16.gmra.mrb[0].mxu0 %v608
      %v696 = vpop.f32.mrb[0].mxu0
      %v697 = vadd.f32 %v483, %v696
      %v698 = vpop.f32.mrb[0].mxu0
      %v699 = vpop.f32.mrb[0].mxu0
      %v700 = vadd.f32 %v486, %v699
      %v701 = vpop.f32.mrb[0].mxu0
      %702 = vmatprep.mubr.bf16.mxu0 0
      %703 = vmatmul.mubr.bf16.gmra.mrb[0].mxu0 %v611
      %v704 = vpop.f32.mrb[0].mxu0
      %v705 = vadd.f32 %v491, %v704
      %v706 = vpop.f32.mrb[0].mxu0
      %v707 = vpop.f32.mrb[0].mxu0
      %v708 = vadd.f32 %v494, %v707
      %v709 = vpop.f32.mrb[0].mxu0
      %710 = vmatprep.mubr.bf16.mxu0 0
      %711 = vmatmul.mubr.bf16.gmra.mrb[0].mxu0 %v614
      %v712 = vpop.f32.mrb[0].mxu0
      %v713 = vadd.f32 %v499, %v712
      %v714 = vpop.f32.mrb[0].mxu0
      %v715 = vpop.f32.mrb[0].mxu0
      %v716 = vadd.f32 %v502, %v715
      %v717 = vpop.f32.mrb[0].mxu0
      %718 = vmatprep.mubr.bf16.mxu0 0
      %719 = vmatmul.mubr.bf16.gmra.mrb[0].mxu0 %v617
      %v720 = vpop.f32.mrb[0].mxu0
      %v721 = vadd.f32 %v507, %v720
      %v722 = vpop.f32.mrb[0].mxu0
      %v723 = vpop.f32.mrb[0].mxu0
      %v724 = vadd.f32 %v510, %v723
      %v725 = vpop.f32.mrb[0].mxu0
      %726 = vmatprep.mubr.bf16.mxu0 0
      %727 = vmatmul.mubr.bf16.gmra.mrb[0].mxu0 %v620
      %v728 = vpop.f32.mrb[0].mxu0
      %v729 = vadd.f32 %v515, %v728
      %v730 = vpop.f32.mrb[0].mxu0
      %v731 = vpop.f32.mrb[0].mxu0
      %v732 = vpop.f32.mrb[0].mxu0
      %733 = vdwg.mxu0
      %v734 = vld [vmem:[%s4] sm:$0x1]
      %v736 = vlaneseq
      %v737 = vshrl.u32 %v736, 7
      %v738 = vsub.s32 0, %v737
      %v739 = vrot.slane %v734, %v738
      %v741 = vadd.f32 %v657, %v739
      %v742 = vadd.f32 %v660, %v739
      %v743 = vadd.f32 %v665, %v739
      %v744 = vadd.f32 %v668, %v739
      %v745 = vadd.f32 %v673, %v739
      %v746 = vadd.f32 %v676, %v739
      %v747 = vadd.f32 %v681, %v739
      %v748 = vadd.f32 %v684, %v739
      %v749 = vadd.f32 %v689, %v739
      %v750 = vadd.f32 %v692, %v739
      %v751 = vadd.f32 %v697, %v739
      %v752 = vadd.f32 %v700, %v739
      %v753 = vadd.f32 %v705, %v739
      %v754 = vadd.f32 %v708, %v739
      %v755 = vadd.f32 %v713, %v739
      %v756 = vadd.f32 %v716, %v739
      %v757 = vadd.f32 %v721, %v739
      %v758 = vadd.f32 %v724, %v739
      %v759 = vadd.f32 %v729, %v739
      %vm760 = vcmask 64512
      %761 = vst.msk [vmem:[%s248] sm:$0xff] %vm760, %v741
      %762 = vst.msk [vmem:[%s248 + $0x8] sm:$0xff] %vm760, %v742
      %763 = vst.msk [vmem:[%s248 + $0x10] sm:$0xff] %vm760, %v743
      %764 = vst.msk [vmem:[%s248 + $0x18] sm:$0xff] %vm760, %v744
      %765 = vst.msk [vmem:[%s248 + $0x20] sm:$0xff] %vm760, %v745
      %766 = vst.msk [vmem:[%s248 + $0x28] sm:$0xff] %vm760, %v746
      %767 = vst.msk [vmem:[%s248 + $0x30] sm:$0xff] %vm760, %v747
      %768 = vst.msk [vmem:[%s248 + $0x38] sm:$0xff] %vm760, %v748
      %769 = vst.msk [vmem:[%s248 + $0x40] sm:$0xff] %vm760, %v749
      %770 = vst.msk [vmem:[%s248 + $0x48] sm:$0xff] %vm760, %v750
      %771 = vst.msk [vmem:[%s248 + $0x50] sm:$0xff] %vm760, %v751
      %772 = vst.msk [vmem:[%s248 + $0x58] sm:$0xff] %vm760, %v752
      %773 = vst.msk [vmem:[%s248 + $0x60] sm:$0xff] %vm760, %v753
      %774 = vst.msk [vmem:[%s248 + $0x68] sm:$0xff] %vm760, %v754
      %775 = vst.msk [vmem:[%s248 + $0x70] sm:$0xff] %vm760, %v755
      %776 = vst.msk [vmem:[%s248 + $0x78] sm:$0xff] %vm760, %v756
      %777 = vst.msk [vmem:[%s248 + $0x80] sm:$0xff] %vm760, %v757
      %778 = vst.msk [vmem:[%s248 + $0x88] sm:$0xff] %vm760, %v758
      %779 = vst.msk [vmem:[%s248 + $0x90] sm:$0xff] %vm760, %v759
      %s780 = smul.u32 19, %s16
      %p781 = scmp.lt.s32.totalorder %s780, 37
      %s782 = scalar_select %p781, %s780, 37
      %s783 = smul.addr %s782, 8
      %s784 = scalar_lea.vmem %s5, %s783
      // Predicated region
      $region41: #{tpu_custom_call.1} parent=39 // pred_check
        %p785 = pneg %p149
      $region42: #{tpu_custom_call.1} parent=39 // pred_check_branch
        %787 = sbr.rel (%p785) target = $region44
      $region43: #{tpu_custom_call.1} parent=39 // pred_region
        %s788 = smul.u32 19, %s16
      $region44: #{tpu_custom_call.1} parent=39 // pred_fallthru
        _
    $region40: #{tpu_custom_call.1} parent=5 // pred_fallthru
      _
    %p789 = scmp.le.s32.totalorder 2, %s11
    // Predicated region
    $region45: #{tpu_custom_call.1} parent=5 // pred_check
      %p790 = pneg %p789
    $region46: #{tpu_custom_call.1} parent=5 // pred_check_branch
      %792 = sbr.rel (%p790) target = $region48
    $region47: #{tpu_custom_call.1} parent=5 // pred_region
      %s793 = ssub.s32 %s11, 2
      // Predicated region
      $region49: #{tpu_custom_call.1} parent=47 // pred_check
        %p794 = pneg %p155
      $region50: #{tpu_custom_call.1} parent=47 // pred_check_branch
        %796 = sbr.rel (%p794) target = $region52
      $region51: #{tpu_custom_call.1} parent=47 // pred_region
        %s797 = smul.u32 19, %s17
        %p798 = scmp.lt.s32.totalorder %s797, 37
        %s799 = scalar_select %p798, %s797, 37
        %s800 = smul.addr %s799, 8
        %s801 = scalar_lea.vmem %s5, %s800
      $region52: #{tpu_custom_call.1} parent=47 // pred_fallthru
        _
    $region48: #{tpu_custom_call.1} parent=5 // pred_fallthru
      _
  $region6: #{tpu_custom_call.1} parent=0 // loop_footer
    %s15 = sadd.s32 1, %s11
  $region7: #{tpu_custom_call.1} parent=0 // loop_footer_branch
    %10 = sbr.rel target = $region3
  $region8: #{tpu_custom_call.1} parent=0 // loop_exit
    _

</llo_original>
